<compile_context>
chip_gen: v6e
topology: v6e:2x2x1
jax: 0.10.0
libtpu: 0.0.40
codegen_flags: <defaults>
</compile_context>

<pallas_src>
import functools

import jax
import jax.numpy as jnp
from jax.experimental import pallas as pl
from jax.experimental.pallas import tpu as pltpu

_LANES = 128
_SUBLANES = 8
_DICE_EPS = 1e-5    # EPS in the PyTorch module
_CE_EPS = 1e-10     # eps inside CrossEntropy.forward


def _round_up(x, m):
    return ((x + m - 1) // m) * m


def _dice_xent_kernel(pred_ref, label_ref,
                      pl_sum_ref, pp_sum_ref, ll_sum_ref,
                      plogp_sum_ref, l_sum_ref):
    """Accumulate the five per-(b, c) partial sums needed by the loss.

    pred_ref / label_ref : (1, 1, block_rows, 128) input blocks (input dtype).
    *_sum_ref outputs    : (1, 1, 8, 128) f32 accumulators; their block index
                           is constant along the innermost ('arbitrary')
                           spatial grid axis, so they stay resident in VMEM
                           for the whole per-(b, c) reduction.
    """
    s = pl.program_id(2)

    @pl.when(s == 0)
    def _init():
        pl_sum_ref[...] = jnp.zeros_like(pl_sum_ref)
        pp_sum_ref[...] = jnp.zeros_like(pp_sum_ref)
        ll_sum_ref[...] = jnp.zeros_like(ll_sum_ref)
        plogp_sum_ref[...] = jnp.zeros_like(plogp_sum_ref)
        l_sum_ref[...] = jnp.zeros_like(l_sum_ref)

    # Cast in-kernel: bf16 inputs are read at half the HBM bytes and widened
    # in-register; all arithmetic/accumulation stays in f32.
    prob = pred_ref[...].astype(jnp.float32)
    lab = label_ref[...].astype(jnp.float32)

    def fold(x):
        # (1, 1, block_rows, 128) -> (1, 1, 8, 128): regroup whole vregs and
        # add them (pure VALU), avoiding a full cross-lane reduction per step.
        return jnp.sum(x.reshape(-1, _SUBLANES, _LANES), axis=0).reshape(
            1, 1, _SUBLANES, _LANES)

    log_p = jnp.log(prob + _CE_EPS)          # EUP; runs under the DMA/VALU

    pl_sum_ref[...] += fold(prob * lab)       # Dice numerator
    pp_sum_ref[...] += fold(prob * prob)      # Dice den1
    ll_sum_ref[...] += fold(lab * lab)        # Dice den2
    plogp_sum_ref[...] += fold(lab * log_p)   # CE numerator
    l_sum_ref[...] += fold(lab)               # CE denominator (mask.sum())


@functools.partial(jax.jit, static_argnames=("row_tile",))
def dice_plus_xentropy_loss(pred, label, *, row_tile=4096):
    """Pallas implementation of DicePlusXEntropyLoss.forward.

    pred, label: (B, C, W, H, D) arrays (any float dtype, simplex along C).
    Returns: scalar float32 loss.
    """
    assert pred.shape == label.shape and pred.ndim == 5
    B, C = pred.shape[:2]
    S = pred.shape[2] * pred.shape[3] * pred.shape[4]

    # Free, contiguous flatten of the spatial dims.
    p3 = pred.reshape(B, C, S)
    l3 = label.reshape(B, C, S)

    rows = -(-S // _LANES)
    block_rows = min(_round_up(row_tile, _SUBLANES), _round_up(rows, _SUBLANES))
    rows_pad = _round_up(rows, block_rows)
    s_pad = rows_pad * _LANES - S
    if s_pad:
        # TODO(synk): this pad copies the inputs once; it is only hit when the
        # spatial volume is not a multiple of the (block_rows * 128) tile.
        # Zero padding is exactly neutral for all five accumulated sums.
        p3 = jnp.pad(p3, ((0, 0), (0, 0), (0, s_pad)))
        l3 = jnp.pad(l3, ((0, 0), (0, 0), (0, s_pad)))

    p4 = p3.reshape(B, C, rows_pad, _LANES)
    l4 = l3.reshape(B, C, rows_pad, _LANES)

    grid = (B, C, rows_pad // block_rows)

    in_spec = pl.BlockSpec((1, 1, block_rows, _LANES),
                           lambda b, c, s: (b, c, s, 0))
    out_spec = pl.BlockSpec((1, 1, _SUBLANES, _LANES),
                            lambda b, c, s: (b, c, 0, 0))
    acc_shape = jax.ShapeDtypeStruct((B, C, _SUBLANES, _LANES), jnp.float32)

    sums = pl.pallas_call(
        _dice_xent_kernel,
        out_shape=(acc_shape,) * 5,
        grid_spec=pltpu.PrefetchScalarGridSpec(
            num_scalar_prefetch=0,
            grid=grid,
            in_specs=[in_spec, in_spec],
            out_specs=[out_spec] * 5,
        ),
        compiler_params=pltpu.CompilerParams(
            dimension_semantics=("parallel", "parallel", "arbitrary"),
        ),
    )(p4, l4)

    # Tiny wrapper-side final reductions: (B, C, 8, 128) -> (B, C) scalars.
    s_pl, s_pp, s_ll, s_plogp, s_l = [x.sum(axis=(-2, -1)) for x in sums]

    # DiceLoss
    dice = 2.0 * s_pl / (s_pp + s_ll + _DICE_EPS)
    dice_loss = (1.0 - dice).mean()

    # CrossEntropy
    ce_loss = -s_plogp.sum() / (s_l.sum() + _CE_EPS)

    return dice_loss + ce_loss


def dice_plus_xentropy_loss_ref(pred, label):
    """Pure-JAX reference matching the PyTorch module."""
    p = pred.astype(jnp.float32)
    t = label.astype(jnp.float32)
    num = (p * t).sum(axis=(2, 3, 4))
    den1 = (p * p).sum(axis=(2, 3, 4))
    den2 = (t * t).sum(axis=(2, 3, 4))
    dice = 2.0 * num / (den1 + den2 + _DICE_EPS)
    dice_loss = (1.0 - dice).mean()
    log_p = jnp.log(p + _CE_EPS)
    ce_loss = -(t * log_p).sum() / (t.sum() + _CE_EPS)
    return dice_loss + ce_loss


if __name__ == "__main__":
    key = jax.random.PRNGKey(0)
    k1, k2 = jax.random.split(key)

    # Small 5-D shapes consistent with einsum 'bcwhd': (B, C, W, H, D)
    B, C, W, H, D = 2, 4, 8, 8, 16

    logits = jax.random.normal(k1, (B, C, W, H, D), dtype=jnp.float32)
    pred = jax.nn.softmax(logits, axis=1)                       # simplex over C
    cls = jax.random.randint(k2, (B, W, H, D), 0, C)
    label = jax.nn.one_hot(cls, C, axis=1, dtype=jnp.float32)   # one-hot target

    out = dice_plus_xentropy_loss(pred, label)
    out = jax.block_until_ready(out)

    ref = dice_plus_xentropy_loss_ref(pred, label)
    assert jnp.allclose(out, ref, rtol=2e-5, atol=1e-5), (out, ref)

    print("KERNEL_OK")
</pallas_src>

<mosaic_0001>
module attributes {stable_mosaic.version = 11 : i64} {
  func.func @_dice_xent_kernel(%arg0: i32, %arg1: i32, %arg2: i32, %arg3: memref<1x1x8x128xf32, #tpu.memory_space<vmem>>, %arg4: memref<1x1x8x128xf32, #tpu.memory_space<vmem>>, %arg5: memref<1x1x8x128xf32, #tpu.memory_space<vmem>>, %arg6: memref<1x1x8x128xf32, #tpu.memory_space<vmem>>, %arg7: memref<1x1x8x128xf32, #tpu.memory_space<vmem>>, %arg8: memref<1x1x8x128xf32, #tpu.memory_space<vmem>>, %arg9: memref<1x1x8x128xf32, #tpu.memory_space<vmem>>) attributes {dimension_semantics = [#tpu.dimension_semantics<parallel>, #tpu.dimension_semantics<parallel>, #tpu.dimension_semantics<arbitrary>], iteration_bounds = array<i64: 2, 4, 1>, scalar_prefetch = 0 : i64, scratch_operands = 0 : i64, tpu.core_type = #tpu.core_type<tc>, window_params = [{transform_indices = @transform_0, window_bounds = array<i64: 1, 1, 8, 128>}, {transform_indices = @transform_1, window_bounds = array<i64: 1, 1, 8, 128>}, {transform_indices = @transform_2, window_bounds = array<i64: 1, 1, 8, 128>}, {transform_indices = @transform_3, window_bounds = array<i64: 1, 1, 8, 128>}, {transform_indices = @transform_4, window_bounds = array<i64: 1, 1, 8, 128>}, {transform_indices = @transform_5, window_bounds = array<i64: 1, 1, 8, 128>}, {transform_indices = @transform_6, window_bounds = array<i64: 1, 1, 8, 128>}]} {
    %c0_i32 = arith.constant 0 : i32
    %0 = arith.cmpi eq, %arg2, %c0_i32 : i32
    %1 = arith.extui %0 : i1 to i32
    %c0_i32_0 = arith.constant 0 : i32
    %2 = arith.cmpi ne, %1, %c0_i32_0 : i32
    scf.if %2 {
      %cst_53 = arith.constant 0.000000e+00 : f32
      %42 = vector.broadcast %cst_53 : f32 to vector<1x1x8x128xf32>
      %c0_54 = arith.constant 0 : index
      %c0_55 = arith.constant 0 : index
      %c0_56 = arith.constant 0 : index
      %c0_57 = arith.constant 0 : index
      %43 = vector.load %arg5[%c0_54, %c0_55, %c0_56, %c0_57] : memref<1x1x8x128xf32, #tpu.memory_space<vmem>>, vector<1x1x8x128xf32>
      tpu.vector_store %arg5[%c0_54, %c0_55, %c0_56, %c0_57], %42 {strides = array<i32>} : memref<1x1x8x128xf32, #tpu.memory_space<vmem>>, vector<1x1x8x128xf32>,
      %cst_58 = arith.constant 0.000000e+00 : f32
      %44 = vector.broadcast %cst_58 : f32 to vector<1x1x8x128xf32>
      %c0_59 = arith.constant 0 : index
      %c0_60 = arith.constant 0 : index
      %c0_61 = arith.constant 0 : index
      %c0_62 = arith.constant 0 : index
      %45 = vector.load %arg6[%c0_59, %c0_60, %c0_61, %c0_62] : memref<1x1x8x128xf32, #tpu.memory_space<vmem>>, vector<1x1x8x128xf32>
      tpu.vector_store %arg6[%c0_59, %c0_60, %c0_61, %c0_62], %44 {strides = array<i32>} : memref<1x1x8x128xf32, #tpu.memory_space<vmem>>, vector<1x1x8x128xf32>,
      %cst_63 = arith.constant 0.000000e+00 : f32
      %46 = vector.broadcast %cst_63 : f32 to vector<1x1x8x128xf32>
      %c0_64 = arith.constant 0 : index
      %c0_65 = arith.constant 0 : index
      %c0_66 = arith.constant 0 : index
      %c0_67 = arith.constant 0 : index
      %47 = vector.load %arg7[%c0_64, %c0_65, %c0_66, %c0_67] : memref<1x1x8x128xf32, #tpu.memory_space<vmem>>, vector<1x1x8x128xf32>
      tpu.vector_store %arg7[%c0_64, %c0_65, %c0_66, %c0_67], %46 {strides = array<i32>} : memref<1x1x8x128xf32, #tpu.memory_space<vmem>>, vector<1x1x8x128xf32>,
      %cst_68 = arith.constant 0.000000e+00 : f32
      %48 = vector.broadcast %cst_68 : f32 to vector<1x1x8x128xf32>
      %c0_69 = arith.constant 0 : index
      %c0_70 = arith.constant 0 : index
      %c0_71 = arith.constant 0 : index
      %c0_72 = arith.constant 0 : index
      %49 = vector.load %arg8[%c0_69, %c0_70, %c0_71, %c0_72] : memref<1x1x8x128xf32, #tpu.memory_space<vmem>>, vector<1x1x8x128xf32>
      tpu.vector_store %arg8[%c0_69, %c0_70, %c0_71, %c0_72], %48 {strides = array<i32>} : memref<1x1x8x128xf32, #tpu.memory_space<vmem>>, vector<1x1x8x128xf32>,
      %cst_73 = arith.constant 0.000000e+00 : f32
      %50 = vector.broadcast %cst_73 : f32 to vector<1x1x8x128xf32>
      %c0_74 = arith.constant 0 : index
      %c0_75 = arith.constant 0 : index
      %c0_76 = arith.constant 0 : index
      %c0_77 = arith.constant 0 : index
      %51 = vector.load %arg9[%c0_74, %c0_75, %c0_76, %c0_77] : memref<1x1x8x128xf32, #tpu.memory_space<vmem>>, vector<1x1x8x128xf32>
      tpu.vector_store %arg9[%c0_74, %c0_75, %c0_76, %c0_77], %50 {strides = array<i32>} : memref<1x1x8x128xf32, #tpu.memory_space<vmem>>, vector<1x1x8x128xf32>,
    } else {
    }
    %c0 = arith.constant 0 : index
    %c0_1 = arith.constant 0 : index
    %c0_2 = arith.constant 0 : index
    %c0_3 = arith.constant 0 : index
    %3 = vector.load %arg3[%c0, %c0_1, %c0_2, %c0_3] : memref<1x1x8x128xf32, #tpu.memory_space<vmem>>, vector<1x1x8x128xf32>
    %c0_4 = arith.constant 0 : index
    %c0_5 = arith.constant 0 : index
    %c0_6 = arith.constant 0 : index
    %c0_7 = arith.constant 0 : index
    %4 = vector.load %arg4[%c0_4, %c0_5, %c0_6, %c0_7] : memref<1x1x8x128xf32, #tpu.memory_space<vmem>>, vector<1x1x8x128xf32>
    %cst = arith.constant 1.000000e-10 : f32
    %5 = vector.broadcast %cst : f32 to vector<1x1x8x128xf32>
    %6 = arith.addf %3, %5 : vector<1x1x8x128xf32>
    %7 = math.log %6 : vector<1x1x8x128xf32>
    %c0_8 = arith.constant 0 : index
    %c0_9 = arith.constant 0 : index
    %c0_10 = arith.constant 0 : index
    %c0_11 = arith.constant 0 : index
    %8 = vector.load %arg5[%c0_8, %c0_9, %c0_10, %c0_11] : memref<1x1x8x128xf32, #tpu.memory_space<vmem>>, vector<1x1x8x128xf32>
    %9 = arith.mulf %3, %4 : vector<1x1x8x128xf32>
    %10 = vector.shape_cast %9 : vector<1x1x8x128xf32> to vector<1x8x128xf32>
    %cst_12 = arith.constant dense<0.000000e+00> : vector<8x128xf32>
    %11 = vector.multi_reduction <add>, %10, %cst_12 [0] : vector<1x8x128xf32> to vector<8x128xf32>
    %12 = vector.shape_cast %11 : vector<8x128xf32> to vector<1x1x8x128xf32>
    %13 = arith.addf %8, %12 : vector<1x1x8x128xf32>
    %c0_13 = arith.constant 0 : index
    %c0_14 = arith.constant 0 : index
    %c0_15 = arith.constant 0 : index
    %c0_16 = arith.constant 0 : index
    %14 = vector.load %arg5[%c0_13, %c0_14, %c0_15, %c0_16] : memref<1x1x8x128xf32, #tpu.memory_space<vmem>>, vector<1x1x8x128xf32>
    tpu.vector_store %arg5[%c0_13, %c0_14, %c0_15, %c0_16], %13 {strides = array<i32>} : memref<1x1x8x128xf32, #tpu.memory_space<vmem>>, vector<1x1x8x128xf32>,
    %c0_17 = arith.constant 0 : index
    %c0_18 = arith.constant 0 : index
    %c0_19 = arith.constant 0 : index
    %c0_20 = arith.constant 0 : index
    %15 = vector.load %arg6[%c0_17, %c0_18, %c0_19, %c0_20] : memref<1x1x8x128xf32, #tpu.memory_space<vmem>>, vector<1x1x8x128xf32>
    %16 = arith.mulf %3, %3 : vector<1x1x8x128xf32>
    %17 = vector.shape_cast %16 : vector<1x1x8x128xf32> to vector<1x8x128xf32>
    %cst_21 = arith.constant dense<0.000000e+00> : vector<8x128xf32>
    %18 = vector.multi_reduction <add>, %17, %cst_21 [0] : vector<1x8x128xf32> to vector<8x128xf32>
    %19 = vector.shape_cast %18 : vector<8x128xf32> to vector<1x1x8x128xf32>
    %20 = arith.addf %15, %19 : vector<1x1x8x128xf32>
    %c0_22 = arith.constant 0 : index
    %c0_23 = arith.constant 0 : index
    %c0_24 = arith.constant 0 : index
    %c0_25 = arith.constant 0 : index
    %21 = vector.load %arg6[%c0_22, %c0_23, %c0_24, %c0_25] : memref<1x1x8x128xf32, #tpu.memory_space<vmem>>, vector<1x1x8x128xf32>
    tpu.vector_store %arg6[%c0_22, %c0_23, %c0_24, %c0_25], %20 {strides = array<i32>} : memref<1x1x8x128xf32, #tpu.memory_space<vmem>>, vector<1x1x8x128xf32>,
    %c0_26 = arith.constant 0 : index
    %c0_27 = arith.constant 0 : index
    %c0_28 = arith.constant 0 : index
    %c0_29 = arith.constant 0 : index
    %22 = vector.load %arg7[%c0_26, %c0_27, %c0_28, %c0_29] : memref<1x1x8x128xf32, #tpu.memory_space<vmem>>, vector<1x1x8x128xf32>
    %23 = arith.mulf %4, %4 : vector<1x1x8x128xf32>
    %24 = vector.shape_cast %23 : vector<1x1x8x128xf32> to vector<1x8x128xf32>
    %cst_30 = arith.constant dense<0.000000e+00> : vector<8x128xf32>
    %25 = vector.multi_reduction <add>, %24, %cst_30 [0] : vector<1x8x128xf32> to vector<8x128xf32>
    %26 = vector.shape_cast %25 : vector<8x128xf32> to vector<1x1x8x128xf32>
    %27 = arith.addf %22, %26 : vector<1x1x8x128xf32>
    %c0_31 = arith.constant 0 : index
    %c0_32 = arith.constant 0 : index
    %c0_33 = arith.constant 0 : index
    %c0_34 = arith.constant 0 : index
    %28 = vector.load %arg7[%c0_31, %c0_32, %c0_33, %c0_34] : memref<1x1x8x128xf32, #tpu.memory_space<vmem>>, vector<1x1x8x128xf32>
    tpu.vector_store %arg7[%c0_31, %c0_32, %c0_33, %c0_34], %27 {strides = array<i32>} : memref<1x1x8x128xf32, #tpu.memory_space<vmem>>, vector<1x1x8x128xf32>,
    %c0_35 = arith.constant 0 : index
    %c0_36 = arith.constant 0 : index
    %c0_37 = arith.constant 0 : index
    %c0_38 = arith.constant 0 : index
    %29 = vector.load %arg8[%c0_35, %c0_36, %c0_37, %c0_38] : memref<1x1x8x128xf32, #tpu.memory_space<vmem>>, vector<1x1x8x128xf32>
    %30 = arith.mulf %4, %7 : vector<1x1x8x128xf32>
    %31 = vector.shape_cast %30 : vector<1x1x8x128xf32> to vector<1x8x128xf32>
    %cst_39 = arith.constant dense<0.000000e+00> : vector<8x128xf32>
    %32 = vector.multi_reduction <add>, %31, %cst_39 [0] : vector<1x8x128xf32> to vector<8x128xf32>
    %33 = vector.shape_cast %32 : vector<8x128xf32> to vector<1x1x8x128xf32>
    %34 = arith.addf %29, %33 : vector<1x1x8x128xf32>
    %c0_40 = arith.constant 0 : index
    %c0_41 = arith.constant 0 : index
    %c0_42 = arith.constant 0 : index
    %c0_43 = arith.constant 0 : index
    %35 = vector.load %arg8[%c0_40, %c0_41, %c0_42, %c0_43] : memref<1x1x8x128xf32, #tpu.memory_space<vmem>>, vector<1x1x8x128xf32>
    tpu.vector_store %arg8[%c0_40, %c0_41, %c0_42, %c0_43], %34 {strides = array<i32>} : memref<1x1x8x128xf32, #tpu.memory_space<vmem>>, vector<1x1x8x128xf32>,
    %c0_44 = arith.constant 0 : index
    %c0_45 = arith.constant 0 : index
    %c0_46 = arith.constant 0 : index
    %c0_47 = arith.constant 0 : index
    %36 = vector.load %arg9[%c0_44, %c0_45, %c0_46, %c0_47] : memref<1x1x8x128xf32, #tpu.memory_space<vmem>>, vector<1x1x8x128xf32>
    %37 = vector.shape_cast %4 : vector<1x1x8x128xf32> to vector<1x8x128xf32>
    %cst_48 = arith.constant dense<0.000000e+00> : vector<8x128xf32>
    %38 = vector.multi_reduction <add>, %37, %cst_48 [0] : vector<1x8x128xf32> to vector<8x128xf32>
    %39 = vector.shape_cast %38 : vector<8x128xf32> to vector<1x1x8x128xf32>
    %40 = arith.addf %36, %39 : vector<1x1x8x128xf32>
    %c0_49 = arith.constant 0 : index
    %c0_50 = arith.constant 0 : index
    %c0_51 = arith.constant 0 : index
    %c0_52 = arith.constant 0 : index
    %41 = vector.load %arg9[%c0_49, %c0_50, %c0_51, %c0_52] : memref<1x1x8x128xf32, #tpu.memory_space<vmem>>, vector<1x1x8x128xf32>
    tpu.vector_store %arg9[%c0_49, %c0_50, %c0_51, %c0_52], %40 {strides = array<i32>} : memref<1x1x8x128xf32, #tpu.memory_space<vmem>>, vector<1x1x8x128xf32>,
    return
  }
  func.func @transform_0(%arg0: i32, %arg1: i32, %arg2: i32) -> (i32, i32, i32, i32) {
    %c0_i32 = arith.constant 0 : i32
    %c0_i32_0 = arith.constant 0 : i32
    return %arg0, %arg1, %arg2, %c0_i32 : i32, i32, i32, i32
  }
  func.func @transform_1(%arg0: i32, %arg1: i32, %arg2: i32) -> (i32, i32, i32, i32) {
    %c0_i32 = arith.constant 0 : i32
    %c0_i32_0 = arith.constant 0 : i32
    return %arg0, %arg1, %arg2, %c0_i32 : i32, i32, i32, i32
  }
  func.func @transform_2(%arg0: i32, %arg1: i32, %arg2: i32) -> (i32, i32, i32, i32) {
    %c0_i32 = arith.constant 0 : i32
    %c0_i32_0 = arith.constant 0 : i32
    %c0_i32_1 = arith.constant 0 : i32
    return %arg0, %arg1, %c0_i32, %c0_i32_0 : i32, i32, i32, i32
  }
  func.func @transform_3(%arg0: i32, %arg1: i32, %arg2: i32) -> (i32, i32, i32, i32) {
    %c0_i32 = arith.constant 0 : i32
    %c0_i32_0 = arith.constant 0 : i32
    %c0_i32_1 = arith.constant 0 : i32
    return %arg0, %arg1, %c0_i32, %c0_i32_0 : i32, i32, i32, i32
  }
  func.func @transform_4(%arg0: i32, %arg1: i32, %arg2: i32) -> (i32, i32, i32, i32) {
    %c0_i32 = arith.constant 0 : i32
    %c0_i32_0 = arith.constant 0 : i32
    %c0_i32_1 = arith.constant 0 : i32
    return %arg0, %arg1, %c0_i32, %c0_i32_0 : i32, i32, i32, i32
  }
  func.func @transform_5(%arg0: i32, %arg1: i32, %arg2: i32) -> (i32, i32, i32, i32) {
    %c0_i32 = arith.constant 0 : i32
    %c0_i32_0 = arith.constant 0 : i32
    %c0_i32_1 = arith.constant 0 : i32
    return %arg0, %arg1, %c0_i32, %c0_i32_0 : i32, i32, i32, i32
  }
  func.func @transform_6(%arg0: i32, %arg1: i32, %arg2: i32) -> (i32, i32, i32, i32) {
    %c0_i32 = arith.constant 0 : i32
    %c0_i32_0 = arith.constant 0 : i32
    %c0_i32_1 = arith.constant 0 : i32
    return %arg0, %arg1, %c0_i32, %c0_i32_0 : i32, i32, i32, i32
  }
}

</mosaic_0001>

<llo_original>
// kernel: dice_plus_xentropy_loss.1
$region0: #{dice_plus_xentropy_loss.1}
  #allocation0 [shape = 'u32[]', space=smem, size = 0x4, offset = 0x4, fixed_abs, tag = 'smem constant byte address 0x4 - core index']
  #allocation1 [shape = 'u32[144,128]{1,0:T(1,128)}', space=vmem, size = 0x12000, scoped, tag = 'internal scratch']
  %s0 = inlined_call_operand.vmem [shape: f32[2,4,8,128], index: 0, kind: input, shape index: {}]
  %s1 = inlined_call_operand.vmem [shape: f32[2,4,8,128], index: 1, kind: input, shape index: {}]
  %s2 = inlined_call_operand.vmem [shape: f32[2,4,8,128], index: 2, kind: output, shape index: {0}]
  %s3 = inlined_call_operand.vmem [shape: f32[2,4,8,128], index: 3, kind: output, shape index: {1}]
  %s4 = inlined_call_operand.vmem [shape: f32[2,4,8,128], index: 4, kind: output, shape index: {2}]
  %s5 = inlined_call_operand.vmem [shape: f32[2,4,8,128], index: 5, kind: output, shape index: {3}]
  %s6 = inlined_call_operand.vmem [shape: f32[2,4,8,128], index: 6, kind: output, shape index: {4}]
  %7 = xla_tuple %s2, %s3, %s4, %s5, %s6
  %s8 = sld [smem:[#allocation0]]
  $region77: #{dice_plus_xentropy_loss.1} parent=0
    _
  %s10 = ssub.s32 1, %s8
  %s11 = scalar_select 0, %s10, %s8
  loop: start=0, step=1, limit=10
  $region2: #{dice_plus_xentropy_loss.1} parent=0 // loop_pre_header
    _
  $region3: #{dice_plus_xentropy_loss.1} parent=0 // loop_header
    %s13 = sphi 0, %s17
    %p14 = scmp.ge.s32.totalorder %s13, 10
    %s20 = sphi 0, %s39
    %s21 = sphi 0, %s35
    %s22 = sphi 0, %s31
    %s23 = sphi 0, %s20
    %s24 = sphi 0, %s21
    %s25 = sphi 0, %s22
    %s26 = sphi 0, %s23
    %s27 = sphi 0, %s24
    %s28 = sphi 0, %s25
    %s46 = sphi 0, %s48
    %s49 = sphi 0, %s46
    %s50 = sphi 0, %s49
    %s66 = sphi 0, %s50
    %s76 = sphi 0, %s78
    %s79 = sphi 0, %s76
    %s80 = sphi 0, %s79
    %s96 = sphi 0, %s80
    %s104 = sphi 0, %s106
    %s107 = sphi 0, %s104
    %s108 = sphi 0, %s107
    %s124 = sphi 0, %s108
    %s132 = sphi 0, %s134
    %s135 = sphi 0, %s132
    %s136 = sphi 0, %s135
    %s152 = sphi 0, %s136
    %s160 = sphi 0, %s162
    %s163 = sphi 0, %s160
    %s164 = sphi 0, %s163
    %s180 = sphi 0, %s164
    %s188 = sphi 0, %s190
    %s191 = sphi 0, %s188
    %s192 = sphi 0, %s191
    %s208 = sphi 0, %s192
    %s216 = sphi 0, %s218
    %s219 = sphi 0, %s216
    %s220 = sphi 0, %s219
    %s236 = sphi 0, %s220
  $region4: #{dice_plus_xentropy_loss.1} parent=0 // loop_header_branch
    %16 = sbr.rel (%p14) target = $region8
  $region5: #{dice_plus_xentropy_loss.1} parent=0 // loop_body
    %s18 = ssub.s32 %s13, 1
    %s19 = ssub.s32 %s13, 2
    %s29 = sadd.s32 1, %s22
    %p30 = scmp.ge.s32.totalorder %s29, 1
    %s31 = scalar_select %p30, 0, %s29
    %s32 = sadd.s32 1, %s21
    %s33 = scalar_select %p30, %s32, %s21
    %p34 = scmp.ge.s32.totalorder %s33, 4
    %s35 = scalar_select %p34, 0, %s33
    %s36 = sadd.s32 1, %s20
    %s37 = scalar_select %p34, %s36, %s20
    %p38 = scmp.ge.s32.totalorder %s37, 2
    %s39 = scalar_select %p38, 0, %s37
    %s40 = ssub.s32 %s20, %s39
    %s41 = ssub.s32 %s21, %s35
    %s42 = sor.u32 %s40, %s41
    %s43 = ssub.s32 %s22, %s31
    %s44 = sor.u32 %s42, %s43
    %p45 = scmp.eq.s32.totalorder %s44, 0
    %s47 = sadd.s32 %s46, 1
    %s48 = scalar_select %p45, %s46, %s47
    %p51 = pneg %p45
    %p52 = scmp.eq.s32.totalorder %s13, 7
    %p53 = por %p51, %p52
    %p54 = scmp.ne.s32.totalorder %s46, %s49
    %p55 = scmp.eq.s32.totalorder %s13, 0
    %p56 = por %p54, %p55
    %p57 = scmp.ne.s32.totalorder %s46, %s49
    %p58 = scmp.eq.s32.totalorder %s18, 7
    %p59 = por %p57, %p58
    %p60 = scmp.ne.s32.totalorder %s49, %s50
    %p61 = scmp.eq.s32.totalorder %s18, 0
    %p62 = por %p60, %p61
    %p63 = scmp.ne.s32.totalorder %s49, %s50
    %p64 = scmp.eq.s32.totalorder %s19, 7
    %p65 = por %p63, %p64
    %p67 = scmp.ne.s32.totalorder %s50, %s66
    %p68 = scmp.eq.s32.totalorder %s19, 0
    %p69 = por %p67, %p68
    %s70 = ssub.s32 %s20, %s39
    %s71 = ssub.s32 %s21, %s35
    %s72 = sor.u32 %s70, %s71
    %s73 = ssub.s32 %s22, %s31
    %s74 = sor.u32 %s72, %s73
    %p75 = scmp.eq.s32.totalorder %s74, 0
    %s77 = sadd.s32 %s76, 1
    %s78 = scalar_select %p75, %s76, %s77
    %p81 = pneg %p75
    %p82 = scmp.eq.s32.totalorder %s13, 7
    %p83 = por %p81, %p82
    %p84 = scmp.ne.s32.totalorder %s76, %s79
    %p85 = scmp.eq.s32.totalorder %s13, 0
    %p86 = por %p84, %p85
    %p87 = scmp.ne.s32.totalorder %s76, %s79
    %p88 = scmp.eq.s32.totalorder %s18, 7
    %p89 = por %p87, %p88
    %p90 = scmp.ne.s32.totalorder %s79, %s80
    %p91 = scmp.eq.s32.totalorder %s18, 0
    %p92 = por %p90, %p91
    %p93 = scmp.ne.s32.totalorder %s79, %s80
    %p94 = scmp.eq.s32.totalorder %s19, 7
    %p95 = por %p93, %p94
    %p97 = scmp.ne.s32.totalorder %s80, %s96
    %p98 = scmp.eq.s32.totalorder %s19, 0
    %p99 = por %p97, %p98
    %s100 = ssub.s32 %s20, %s39
    %s101 = ssub.s32 %s21, %s35
    %s102 = sor.u32 %s100, %s101
    %p103 = scmp.eq.s32.totalorder %s102, 0
    %s105 = sadd.s32 %s104, 1
    %s106 = scalar_select %p103, %s104, %s105
    %p109 = pneg %p103
    %p110 = scmp.eq.s32.totalorder %s13, 7
    %p111 = por %p109, %p110
    %p112 = scmp.ne.s32.totalorder %s104, %s107
    %p113 = scmp.eq.s32.totalorder %s13, 0
    %p114 = por %p112, %p113
    %p115 = scmp.ne.s32.totalorder %s104, %s107
    %p116 = scmp.eq.s32.totalorder %s18, 7
    %p117 = por %p115, %p116
    %p118 = scmp.ne.s32.totalorder %s107, %s108
    %p119 = scmp.eq.s32.totalorder %s18, 0
    %p120 = por %p118, %p119
    %p121 = scmp.ne.s32.totalorder %s107, %s108
    %p122 = scmp.eq.s32.totalorder %s19, 7
    %p123 = por %p121, %p122
    %p125 = scmp.ne.s32.totalorder %s108, %s124
    %p126 = scmp.eq.s32.totalorder %s19, 0
    %p127 = por %p125, %p126
    %s128 = ssub.s32 %s20, %s39
    %s129 = ssub.s32 %s21, %s35
    %s130 = sor.u32 %s128, %s129
    %p131 = scmp.eq.s32.totalorder %s130, 0
    %s133 = sadd.s32 %s132, 1
    %s134 = scalar_select %p131, %s132, %s133
    %p137 = pneg %p131
    %p138 = scmp.eq.s32.totalorder %s13, 7
    %p139 = por %p137, %p138
    %p140 = scmp.ne.s32.totalorder %s132, %s135
    %p141 = scmp.eq.s32.totalorder %s13, 0
    %p142 = por %p140, %p141
    %p143 = scmp.ne.s32.totalorder %s132, %s135
    %p144 = scmp.eq.s32.totalorder %s18, 7
    %p145 = por %p143, %p144
    %p146 = scmp.ne.s32.totalorder %s135, %s136
    %p147 = scmp.eq.s32.totalorder %s18, 0
    %p148 = por %p146, %p147
    %p149 = scmp.ne.s32.totalorder %s135, %s136
    %p150 = scmp.eq.s32.totalorder %s19, 7
    %p151 = por %p149, %p150
    %p153 = scmp.ne.s32.totalorder %s136, %s152
    %p154 = scmp.eq.s32.totalorder %s19, 0
    %p155 = por %p153, %p154
    %s156 = ssub.s32 %s20, %s39
    %s157 = ssub.s32 %s21, %s35
    %s158 = sor.u32 %s156, %s157
    %p159 = scmp.eq.s32.totalorder %s158, 0
    %s161 = sadd.s32 %s160, 1
    %s162 = scalar_select %p159, %s160, %s161
    %p165 = pneg %p159
    %p166 = scmp.eq.s32.totalorder %s13, 7
    %p167 = por %p165, %p166
    %p168 = scmp.ne.s32.totalorder %s160, %s163
    %p169 = scmp.eq.s32.totalorder %s13, 0
    %p170 = por %p168, %p169
    %p171 = scmp.ne.s32.totalorder %s160, %s163
    %p172 = scmp.eq.s32.totalorder %s18, 7
    %p173 = por %p171, %p172
    %p174 = scmp.ne.s32.totalorder %s163, %s164
    %p175 = scmp.eq.s32.totalorder %s18, 0
    %p176 = por %p174, %p175
    %p177 = scmp.ne.s32.totalorder %s163, %s164
    %p178 = scmp.eq.s32.totalorder %s19, 7
    %p179 = por %p177, %p178
    %p181 = scmp.ne.s32.totalorder %s164, %s180
    %p182 = scmp.eq.s32.totalorder %s19, 0
    %p183 = por %p181, %p182
    %s184 = ssub.s32 %s20, %s39
    %s185 = ssub.s32 %s21, %s35
    %s186 = sor.u32 %s184, %s185
    %p187 = scmp.eq.s32.totalorder %s186, 0
    %s189 = sadd.s32 %s188, 1
    %s190 = scalar_select %p187, %s188, %s189
    %p193 = pneg %p187
    %p194 = scmp.eq.s32.totalorder %s13, 7
    %p195 = por %p193, %p194
    %p196 = scmp.ne.s32.totalorder %s188, %s191
    %p197 = scmp.eq.s32.totalorder %s13, 0
    %p198 = por %p196, %p197
    %p199 = scmp.ne.s32.totalorder %s188, %s191
    %p200 = scmp.eq.s32.totalorder %s18, 7
    %p201 = por %p199, %p200
    %p202 = scmp.ne.s32.totalorder %s191, %s192
    %p203 = scmp.eq.s32.totalorder %s18, 0
    %p204 = por %p202, %p203
    %p205 = scmp.ne.s32.totalorder %s191, %s192
    %p206 = scmp.eq.s32.totalorder %s19, 7
    %p207 = por %p205, %p206
    %p209 = scmp.ne.s32.totalorder %s192, %s208
    %p210 = scmp.eq.s32.totalorder %s19, 0
    %p211 = por %p209, %p210
    %s212 = ssub.s32 %s20, %s39
    %s213 = ssub.s32 %s21, %s35
    %s214 = sor.u32 %s212, %s213
    %p215 = scmp.eq.s32.totalorder %s214, 0
    %s217 = sadd.s32 %s216, 1
    %s218 = scalar_select %p215, %s216, %s217
    %p221 = pneg %p215
    %p222 = scmp.eq.s32.totalorder %s13, 7
    %p223 = por %p221, %p222
    %p224 = scmp.ne.s32.totalorder %s216, %s219
    %p225 = scmp.eq.s32.totalorder %s13, 0
    %p226 = por %p224, %p225
    %p227 = scmp.ne.s32.totalorder %s216, %s219
    %p228 = scmp.eq.s32.totalorder %s18, 7
    %p229 = por %p227, %p228
    %p230 = scmp.ne.s32.totalorder %s219, %s220
    %p231 = scmp.eq.s32.totalorder %s18, 0
    %p232 = por %p230, %p231
    %p233 = scmp.ne.s32.totalorder %s219, %s220
    %p234 = scmp.eq.s32.totalorder %s19, 7
    %p235 = por %p233, %p234
    %p237 = scmp.ne.s32.totalorder %s220, %s236
    %p238 = scmp.eq.s32.totalorder %s19, 0
    %p239 = por %p237, %p238
    %p240 = scmp.le.s32.totalorder 1, %s13
    %p241 = scmp.lt.s32.totalorder %s13, 9
    %p242 = pnand %p240, %p241
    %p243 = pneg %p242
    // Predicated region
    $region9: #{dice_plus_xentropy_loss.1} parent=5 // pred_check
      _
    $region10: #{dice_plus_xentropy_loss.1} parent=5 // pred_check_branch
      %245 = sbr.rel (%p242) target = $region12
    $region11: #{dice_plus_xentropy_loss.1} parent=5 // pred_region
      %s246 = ssub.s32 %s13, 1
    $region12: #{dice_plus_xentropy_loss.1} parent=5 // pred_fallthru
      _
    %p247 = scmp.lt.s32.totalorder %s13, 8
    // Predicated region
    $region13: #{dice_plus_xentropy_loss.1} parent=5 // pred_check
      %p248 = pneg %p247
    $region14: #{dice_plus_xentropy_loss.1} parent=5 // pred_check_branch
      %250 = sbr.rel (%p248) target = $region16
    $region15: #{dice_plus_xentropy_loss.1} parent=5 // pred_region
      // Predicated region
      $region17: #{dice_plus_xentropy_loss.1} parent=15 // pred_check
        %p251 = pneg %p56
      $region18: #{dice_plus_xentropy_loss.1} parent=15 // pred_check_branch
        %253 = sbr.rel (%p251) target = $region20
      $region19: #{dice_plus_xentropy_loss.1} parent=15 // pred_region
        %p254 = scmp.lt.s32.totalorder %s20, 1
        %s255 = scalar_select %p254, %s20, 1
        %p256 = scmp.lt.s32.totalorder %s21, 3
        %s257 = scalar_select %p256, %s21, 3
        %p258 = scmp.lt.s32.totalorder %s22, 0
        %s259 = scalar_select %p258, %s22, 0
        %s260 = sadd.s32 %s259, %s257
        %s261 = smul.addr %s255, 4
        %s262 = sadd.s32 %s260, %s261
        %s263 = smul.addr %s262, 8
        %s264 = scalar_lea.vmem %s0, %s263
      $region20: #{dice_plus_xentropy_loss.1} parent=15 // pred_fallthru
        _
      // Predicated region
      $region21: #{dice_plus_xentropy_loss.1} parent=15 // pred_check
        %p265 = pneg %p86
      $region22: #{dice_plus_xentropy_loss.1} parent=15 // pred_check_branch
        %267 = sbr.rel (%p265) target = $region24
      $region23: #{dice_plus_xentropy_loss.1} parent=15 // pred_region
        %p268 = scmp.lt.s32.totalorder %s20, 1
        %s269 = scalar_select %p268, %s20, 1
        %p270 = scmp.lt.s32.totalorder %s21, 3
        %s271 = scalar_select %p270, %s21, 3
        %p272 = scmp.lt.s32.totalorder %s22, 0
        %s273 = scalar_select %p272, %s22, 0
        %s274 = sadd.s32 %s273, %s271
        %s275 = smul.addr %s269, 4
        %s276 = sadd.s32 %s274, %s275
        %s277 = smul.addr %s276, 8
        %s278 = scalar_lea.vmem %s1, %s277
      $region24: #{dice_plus_xentropy_loss.1} parent=15 // pred_fallthru
        _
    $region16: #{dice_plus_xentropy_loss.1} parent=5 // pred_fallthru
      _
    %p279 = scmp.le.s32.totalorder 1, %s13
    %p280 = scmp.lt.s32.totalorder %s13, 9
    %p281 = pnand %p279, %p280
    %p282 = pneg %p281
    // Predicated region
    $region25: #{dice_plus_xentropy_loss.1} parent=5 // pred_check
      _
    $region26: #{dice_plus_xentropy_loss.1} parent=5 // pred_check_branch
      %284 = sbr.rel (%p281) target = $region28
    $region27: #{dice_plus_xentropy_loss.1} parent=5 // pred_region
      %s285 = ssub.s32 %s13, 1
      %p286 = scmp.lt.s32.totalorder %s23, 1
      %s287 = scalar_select %p286, %s23, 1
      %p288 = scmp.lt.s32.totalorder %s24, 3
      %s289 = scalar_select %p288, %s24, 3
      %p290 = scmp.lt.s32.totalorder %s25, 0
      %s291 = scalar_select %p290, %s25, 0
      %s292 = sadd.s32 %s291, %s289
      %s293 = smul.addr %s287, 4
      %s294 = sadd.s32 %s292, %s293
      %s295 = smul.addr %s294, 8
      %s296 = scalar_lea.vmem %s0, %s295
      %p297 = pneg %p62
      %p298 = pneg %p59
      %p299 = scmp.lt.s32.totalorder %s23, 1
      %s300 = scalar_select %p299, %s23, 1
      %p301 = scmp.lt.s32.totalorder %s24, 3
      %s302 = scalar_select %p301, %s24, 3
      %p303 = scmp.lt.s32.totalorder %s25, 0
      %s304 = scalar_select %p303, %s25, 0
      %s305 = sadd.s32 %s304, %s302
      %s306 = smul.addr %s300, 4
      %s307 = sadd.s32 %s305, %s306
      %s308 = smul.addr %s307, 8
      %s309 = scalar_lea.vmem %s1, %s308
      %p310 = pneg %p92
      %p311 = pneg %p89
      %p312 = pneg %p120
      %p313 = pneg %p117
      %p314 = scmp.lt.s32.totalorder %s23, 1
      %s315 = scalar_select %p314, %s23, 1
      %p316 = scmp.lt.s32.totalorder %s24, 3
      %s317 = scalar_select %p316, %s24, 3
      %s318 = smul.addr %s315, 4
      %s319 = sadd.s32 %s317, %s318
      %s320 = smul.addr %s319, 8
      %s321 = scalar_lea.vmem %s2, %s320
      %p322 = pneg %p148
      %p323 = pneg %p145
      %p324 = scmp.lt.s32.totalorder %s23, 1
      %s325 = scalar_select %p324, %s23, 1
      %p326 = scmp.lt.s32.totalorder %s24, 3
      %s327 = scalar_select %p326, %s24, 3
      %s328 = smul.addr %s325, 4
      %s329 = sadd.s32 %s327, %s328
      %s330 = smul.addr %s329, 8
      %s331 = scalar_lea.vmem %s3, %s330
      %p332 = pneg %p176
      %p333 = pneg %p173
      %p334 = scmp.lt.s32.totalorder %s23, 1
      %s335 = scalar_select %p334, %s23, 1
      %p336 = scmp.lt.s32.totalorder %s24, 3
      %s337 = scalar_select %p336, %s24, 3
      %s338 = smul.addr %s335, 4
      %s339 = sadd.s32 %s337, %s338
      %s340 = smul.addr %s339, 8
      %s341 = scalar_lea.vmem %s4, %s340
      %p342 = pneg %p204
      %p343 = pneg %p201
      %p344 = scmp.lt.s32.totalorder %s23, 1
      %s345 = scalar_select %p344, %s23, 1
      %p346 = scmp.lt.s32.totalorder %s24, 3
      %s347 = scalar_select %p346, %s24, 3
      %s348 = smul.addr %s345, 4
      %s349 = sadd.s32 %s347, %s348
      %s350 = smul.addr %s349, 8
      %s351 = scalar_lea.vmem %s5, %s350
      %p352 = pneg %p232
      %p353 = pneg %p229
      %p354 = scmp.lt.s32.totalorder %s23, 1
      %s355 = scalar_select %p354, %s23, 1
      %p356 = scmp.lt.s32.totalorder %s24, 3
      %s357 = scalar_select %p356, %s24, 3
      %s358 = smul.addr %s355, 4
      %s359 = sadd.s32 %s357, %s358
      %s360 = smul.addr %s359, 8
      %s361 = scalar_lea.vmem %s6, %s360
      %p362 = scmp.lt.s32.totalorder %s23, 1
      %s363 = scalar_select %p362, %s23, 1
      %p364 = scmp.lt.s32.totalorder %s24, 3
      %s365 = scalar_select %p364, %s24, 3
      %p366 = scmp.lt.s32.totalorder %s25, 0
      %s367 = scalar_select %p366, %s25, 0
      %s368 = sadd.s32 %s367, %s365
      %s369 = smul.addr %s363, 4
      %s370 = sadd.s32 %s368, %s369
      %s371 = smul.addr %s370, 8
      %s372 = scalar_lea.vmem %s0, %s371
      %p373 = scmp.lt.s32.totalorder %s23, 1
      %s374 = scalar_select %p373, %s23, 1
      %p375 = scmp.lt.s32.totalorder %s24, 3
      %s376 = scalar_select %p375, %s24, 3
      %p377 = scmp.lt.s32.totalorder %s25, 0
      %s378 = scalar_select %p377, %s25, 0
      %s379 = sadd.s32 %s378, %s376
      %s380 = smul.addr %s374, 4
      %s381 = sadd.s32 %s379, %s380
      %s382 = smul.addr %s381, 8
      %s383 = scalar_lea.vmem %s1, %s382
      %p384 = scmp.lt.s32.totalorder %s23, 1
      %s385 = scalar_select %p384, %s23, 1
      %p386 = scmp.lt.s32.totalorder %s24, 3
      %s387 = scalar_select %p386, %s24, 3
      %s388 = smul.addr %s385, 4
      %s389 = sadd.s32 %s387, %s388
      %s390 = smul.addr %s389, 8
      %s391 = scalar_lea.vmem %s2, %s390
      %p392 = scmp.lt.s32.totalorder %s23, 1
      %s393 = scalar_select %p392, %s23, 1
      %p394 = scmp.lt.s32.totalorder %s24, 3
      %s395 = scalar_select %p394, %s24, 3
      %s396 = smul.addr %s393, 4
      %s397 = sadd.s32 %s395, %s396
      %s398 = smul.addr %s397, 8
      %s399 = scalar_lea.vmem %s3, %s398
      %p400 = scmp.lt.s32.totalorder %s23, 1
      %s401 = scalar_select %p400, %s23, 1
      %p402 = scmp.lt.s32.totalorder %s24, 3
      %s403 = scalar_select %p402, %s24, 3
      %s404 = smul.addr %s401, 4
      %s405 = sadd.s32 %s403, %s404
      %s406 = smul.addr %s405, 8
      %s407 = scalar_lea.vmem %s4, %s406
      %p408 = scmp.lt.s32.totalorder %s23, 1
      %s409 = scalar_select %p408, %s23, 1
      %p410 = scmp.lt.s32.totalorder %s24, 3
      %s411 = scalar_select %p410, %s24, 3
      %s412 = smul.addr %s409, 4
      %s413 = sadd.s32 %s411, %s412
      %s414 = smul.addr %s413, 8
      %s415 = scalar_lea.vmem %s5, %s414
      %p416 = scmp.lt.s32.totalorder %s23, 1
      %s417 = scalar_select %p416, %s23, 1
      %p418 = scmp.lt.s32.totalorder %s24, 3
      %s419 = scalar_select %p418, %s24, 3
      %s420 = smul.addr %s417, 4
      %s421 = sadd.s32 %s419, %s420
      %s422 = smul.addr %s421, 8
      %s423 = scalar_lea.vmem %s6, %s422
      %p424 = scmp.eq.s32.totalorder %s25, 0
      // Predicated region
      $region29: #{dice_plus_xentropy_loss.1} parent=27 // pred_check
        %p425 = pneg %p424
      $region30: #{dice_plus_xentropy_loss.1} parent=27 // pred_check_branch
        %427 = sbr.rel (%p425) target = $region32
      $region31: #{dice_plus_xentropy_loss.1} parent=27 // pred_region
        %428 = vst [vmem:[%s391] sm:$0xff] 0.0
        %429 = vst [vmem:[%s399] sm:$0xff] 0.0
        %430 = vst [vmem:[%s407] sm:$0xff] 0.0
        %431 = vst [vmem:[%s415] sm:$0xff] 0.0
        %432 = vst [vmem:[%s423] sm:$0xff] 0.0
      $region32: #{dice_plus_xentropy_loss.1} parent=27 // pred_fallthru
        _
      %v433 = vld [vmem:[%s372] sm:$0xff]
      %v434 = vld [vmem:[%s383] sm:$0xff]
      %v435 = vadd.f32 %v433, 1e-10
      %v436 = vlog2.pop %v435
      %v437 = vmul.f32 %v436, 0.6931472
      %v438 = vld [vmem:[%s391] sm:$0xff]
      %v439 = vmul.f32 %v433, %v434
      %v440 = vadd.f32 %v439, 0.0
      %v441 = vadd.f32 %v438, %v440
      %442 = vst [vmem:[%s391] sm:$0xff] %v441
      %v443 = vld [vmem:[%s399] sm:$0xff]
      %v444 = vmul.f32 %v433, %v433
      %v445 = vadd.f32 %v444, 0.0
      %v446 = vadd.f32 %v443, %v445
      %447 = vst [vmem:[%s399] sm:$0xff] %v446
      %v448 = vld [vmem:[%s407] sm:$0xff]
      %v449 = vmul.f32 %v434, %v434
      %v450 = vadd.f32 %v449, 0.0
      %v451 = vadd.f32 %v448, %v450
      %452 = vst [vmem:[%s407] sm:$0xff] %v451
      %v453 = vld [vmem:[%s415] sm:$0xff]
      %v454 = vmul.f32 %v434, %v437
      %v455 = vadd.f32 %v454, 0.0
      %v456 = vadd.f32 %v453, %v455
      %457 = vst [vmem:[%s415] sm:$0xff] %v456
      %v458 = vld [vmem:[%s423] sm:$0xff]
      %v459 = vadd.f32 %v434, 0.0
      %v460 = vadd.f32 %v458, %v459
      %461 = vst [vmem:[%s423] sm:$0xff] %v460
      %p462 = scmp.lt.s32.totalorder %s23, 1
      %s463 = scalar_select %p462, %s23, 1
      %p464 = scmp.lt.s32.totalorder %s24, 3
      %s465 = scalar_select %p464, %s24, 3
      %s466 = smul.addr %s463, 4
      %s467 = sadd.s32 %s465, %s466
      %s468 = smul.addr %s467, 8
      %s469 = scalar_lea.vmem %s2, %s468
      %p470 = scmp.lt.s32.totalorder %s23, 1
      %s471 = scalar_select %p470, %s23, 1
      %p472 = scmp.lt.s32.totalorder %s24, 3
      %s473 = scalar_select %p472, %s24, 3
      %s474 = smul.addr %s471, 4
      %s475 = sadd.s32 %s473, %s474
      %s476 = smul.addr %s475, 8
      %s477 = scalar_lea.vmem %s3, %s476
      %p478 = scmp.lt.s32.totalorder %s23, 1
      %s479 = scalar_select %p478, %s23, 1
      %p480 = scmp.lt.s32.totalorder %s24, 3
      %s481 = scalar_select %p480, %s24, 3
      %s482 = smul.addr %s479, 4
      %s483 = sadd.s32 %s481, %s482
      %s484 = smul.addr %s483, 8
      %s485 = scalar_lea.vmem %s4, %s484
      %p486 = scmp.lt.s32.totalorder %s23, 1
      %s487 = scalar_select %p486, %s23, 1
      %p488 = scmp.lt.s32.totalorder %s24, 3
      %s489 = scalar_select %p488, %s24, 3
      %s490 = smul.addr %s487, 4
      %s491 = sadd.s32 %s489, %s490
      %s492 = smul.addr %s491, 8
      %s493 = scalar_lea.vmem %s5, %s492
      %p494 = scmp.lt.s32.totalorder %s23, 1
      %s495 = scalar_select %p494, %s23, 1
      %p496 = scmp.lt.s32.totalorder %s24, 3
      %s497 = scalar_select %p496, %s24, 3
      %s498 = smul.addr %s495, 4
      %s499 = sadd.s32 %s497, %s498
      %s500 = smul.addr %s499, 8
      %s501 = scalar_lea.vmem %s6, %s500
      // Predicated region
      $region33: #{dice_plus_xentropy_loss.1} parent=27 // pred_check
        %p502 = pneg %p117
      $region34: #{dice_plus_xentropy_loss.1} parent=27 // pred_check_branch
        %504 = sbr.rel (%p502) target = $region36
      $region35: #{dice_plus_xentropy_loss.1} parent=27 // pred_region
        _
      $region36: #{dice_plus_xentropy_loss.1} parent=27 // pred_fallthru
        _
      // Predicated region
      $region37: #{dice_plus_xentropy_loss.1} parent=27 // pred_check
        %p505 = pneg %p145
      $region38: #{dice_plus_xentropy_loss.1} parent=27 // pred_check_branch
        %507 = sbr.rel (%p505) target = $region40
      $region39: #{dice_plus_xentropy_loss.1} parent=27 // pred_region
        _
      $region40: #{dice_plus_xentropy_loss.1} parent=27 // pred_fallthru
        _
      // Predicated region
      $region41: #{dice_plus_xentropy_loss.1} parent=27 // pred_check
        %p508 = pneg %p173
      $region42: #{dice_plus_xentropy_loss.1} parent=27 // pred_check_branch
        %510 = sbr.rel (%p508) target = $region44
      $region43: #{dice_plus_xentropy_loss.1} parent=27 // pred_region
        _
      $region44: #{dice_plus_xentropy_loss.1} parent=27 // pred_fallthru
        _
      // Predicated region
      $region45: #{dice_plus_xentropy_loss.1} parent=27 // pred_check
        %p511 = pneg %p201
      $region46: #{dice_plus_xentropy_loss.1} parent=27 // pred_check_branch
        %513 = sbr.rel (%p511) target = $region48
      $region47: #{dice_plus_xentropy_loss.1} parent=27 // pred_region
        _
      $region48: #{dice_plus_xentropy_loss.1} parent=27 // pred_fallthru
        _
      // Predicated region
      $region49: #{dice_plus_xentropy_loss.1} parent=27 // pred_check
        %p514 = pneg %p229
      $region50: #{dice_plus_xentropy_loss.1} parent=27 // pred_check_branch
        %516 = sbr.rel (%p514) target = $region52
      $region51: #{dice_plus_xentropy_loss.1} parent=27 // pred_region
        _
      $region52: #{dice_plus_xentropy_loss.1} parent=27 // pred_fallthru
        _
    $region28: #{dice_plus_xentropy_loss.1} parent=5 // pred_fallthru
      _
    %p517 = scmp.le.s32.totalorder 2, %s13
    // Predicated region
    $region53: #{dice_plus_xentropy_loss.1} parent=5 // pred_check
      %p518 = pneg %p517
    $region54: #{dice_plus_xentropy_loss.1} parent=5 // pred_check_branch
      %520 = sbr.rel (%p518) target = $region56
    $region55: #{dice_plus_xentropy_loss.1} parent=5 // pred_region
      %s521 = ssub.s32 %s13, 2
      // Predicated region
      $region57: #{dice_plus_xentropy_loss.1} parent=55 // pred_check
        %p522 = pneg %p123
      $region58: #{dice_plus_xentropy_loss.1} parent=55 // pred_check_branch
        %524 = sbr.rel (%p522) target = $region60
      $region59: #{dice_plus_xentropy_loss.1} parent=55 // pred_region
        %p525 = scmp.lt.s32.totalorder %s26, 1
        %s526 = scalar_select %p525, %s26, 1
        %p527 = scmp.lt.s32.totalorder %s27, 3
        %s528 = scalar_select %p527, %s27, 3
        %s529 = smul.addr %s526, 4
        %s530 = sadd.s32 %s528, %s529
        %s531 = smul.addr %s530, 8
        %s532 = scalar_lea.vmem %s2, %s531
      $region60: #{dice_plus_xentropy_loss.1} parent=55 // pred_fallthru
        _
      // Predicated region
      $region61: #{dice_plus_xentropy_loss.1} parent=55 // pred_check
        %p533 = pneg %p151
      $region62: #{dice_plus_xentropy_loss.1} parent=55 // pred_check_branch
        %535 = sbr.rel (%p533) target = $region64
      $region63: #{dice_plus_xentropy_loss.1} parent=55 // pred_region
        %p536 = scmp.lt.s32.totalorder %s26, 1
        %s537 = scalar_select %p536, %s26, 1
        %p538 = scmp.lt.s32.totalorder %s27, 3
        %s539 = scalar_select %p538, %s27, 3
        %s540 = smul.addr %s537, 4
        %s541 = sadd.s32 %s539, %s540
        %s542 = smul.addr %s541, 8
        %s543 = scalar_lea.vmem %s3, %s542
      $region64: #{dice_plus_xentropy_loss.1} parent=55 // pred_fallthru
        _
      // Predicated region
      $region65: #{dice_plus_xentropy_loss.1} parent=55 // pred_check
        %p544 = pneg %p179
      $region66: #{dice_plus_xentropy_loss.1} parent=55 // pred_check_branch
        %546 = sbr.rel (%p544) target = $region68
      $region67: #{dice_plus_xentropy_loss.1} parent=55 // pred_region
        %p547 = scmp.lt.s32.totalorder %s26, 1
        %s548 = scalar_select %p547, %s26, 1
        %p549 = scmp.lt.s32.totalorder %s27, 3
        %s550 = scalar_select %p549, %s27, 3
        %s551 = smul.addr %s548, 4
        %s552 = sadd.s32 %s550, %s551
        %s553 = smul.addr %s552, 8
        %s554 = scalar_lea.vmem %s4, %s553
      $region68: #{dice_plus_xentropy_loss.1} parent=55 // pred_fallthru
        _
      // Predicated region
      $region69: #{dice_plus_xentropy_loss.1} parent=55 // pred_check
        %p555 = pneg %p207
      $region70: #{dice_plus_xentropy_loss.1} parent=55 // pred_check_branch
        %557 = sbr.rel (%p555) target = $region72
      $region71: #{dice_plus_xentropy_loss.1} parent=55 // pred_region
        %p558 = scmp.lt.s32.totalorder %s26, 1
        %s559 = scalar_select %p558, %s26, 1
        %p560 = scmp.lt.s32.totalorder %s27, 3
        %s561 = scalar_select %p560, %s27, 3
        %s562 = smul.addr %s559, 4
        %s563 = sadd.s32 %s561, %s562
        %s564 = smul.addr %s563, 8
        %s565 = scalar_lea.vmem %s5, %s564
      $region72: #{dice_plus_xentropy_loss.1} parent=55 // pred_fallthru
        _
      // Predicated region
      $region73: #{dice_plus_xentropy_loss.1} parent=55 // pred_check
        %p566 = pneg %p235
      $region74: #{dice_plus_xentropy_loss.1} parent=55 // pred_check_branch
        %568 = sbr.rel (%p566) target = $region76
      $region75: #{dice_plus_xentropy_loss.1} parent=55 // pred_region
        %p569 = scmp.lt.s32.totalorder %s26, 1
        %s570 = scalar_select %p569, %s26, 1
        %p571 = scmp.lt.s32.totalorder %s27, 3
        %s572 = scalar_select %p571, %s27, 3
        %s573 = smul.addr %s570, 4
        %s574 = sadd.s32 %s572, %s573
        %s575 = smul.addr %s574, 8
        %s576 = scalar_lea.vmem %s6, %s575
      $region76: #{dice_plus_xentropy_loss.1} parent=55 // pred_fallthru
        _
    $region56: #{dice_plus_xentropy_loss.1} parent=5 // pred_fallthru
      _
  $region6: #{dice_plus_xentropy_loss.1} parent=0 // loop_footer
    %s17 = sadd.s32 1, %s13
  $region7: #{dice_plus_xentropy_loss.1} parent=0 // loop_footer_branch
    %12 = sbr.rel target = $region3
  $region8: #{dice_plus_xentropy_loss.1} parent=0 // loop_exit
    _

</llo_original>
